<compile_context>
chip_gen: v5e
topology: v5e:2x2
jax: 0.10.0
libtpu: 0.0.40
codegen_flags: <defaults>
</compile_context>

<pallas_src>
import functools

import jax
import jax.numpy as jnp
from jax.experimental import pallas as pl
from jax.experimental.pallas import tpu as pltpu


def _focal_loss_kernel(logits_ref, targets_ref, out_ref, *, gamma):
    # logits_ref: (TN, C) raw dtype, targets_ref: (TN, 1) int32,
    # out_ref: (TN, 1) f32 — unscaled per-row focal term (1-pt)^gamma * ce.
    raw = logits_ref[...]                                   # (TN, C) raw dtype
    logits = raw.astype(jnp.float32)                        # no-op if f32 input
    tgt = targets_ref[...]                                  # (TN, 1) int32
    rows, c = raw.shape

    # Stable log-sum-exp.  `logits - m` is consumed only by exp(), so Mosaic
    # can stream load -> subtract -> exp -> accumulate per vreg without
    # materializing a second (TN, C) f32 pass.
    m = jnp.max(logits, axis=-1, keepdims=True)             # (TN, 1)
    s = jnp.sum(jnp.exp(logits - m), axis=-1, keepdims=True)

    # Target-logit gather without a one-hot f32 temporary; compare/select on
    # the un-cast logits (exact: only one nonzero element per row).
    col = jax.lax.broadcasted_iota(jnp.int32, (rows, c), 1)
    tgt_logit = jnp.sum(jnp.where(col == tgt, raw, 0.0),
                        axis=-1, keepdims=True).astype(jnp.float32)
    # TODO(synk): out-of-range / ignore_index-style targets are not detected
    # here; they silently yield tgt_logit = 0 -> ce = logsumexp(logits).

    ce = (jnp.log(s) + m) - tgt_logit                       # (TN, 1) cross-entropy
    pt = jnp.exp(-ce)                                       # prob of target class

    g = float(gamma)
    if g == 2.0:
        mod = jnp.square(1.0 - pt)
    elif g == 1.0:
        mod = 1.0 - pt
    elif g == 0.0:
        mod = jnp.ones_like(pt)
    else:
        mod = jnp.maximum(1.0 - pt, 0.0) ** jnp.float32(g)

    # No padded-row masking needed: the last partial block's writeback is
    # clipped to the (N, 1) output array, so rows >= N never reach HBM.
    out_ref[...] = mod * ce


def focal_loss(logits: jnp.ndarray, targets: jnp.ndarray,
               alpha: float = 0.25, gamma: float = 2.0,
               vmem_budget_bytes: int = 12 * 1024 * 1024) -> jnp.ndarray:
    """Mean focal loss. logits: (N, C) float (f32 or bf16), targets: (N,) int.
    Returns scalar f32."""
    N, C = logits.shape
    targets_2d = targets.astype(jnp.int32).reshape(N, 1)

    # --- row-tile sizing against the REAL VMEM footprint -------------------
    # Per row: 2x raw logits (double-buffered DMA) + ~6 f32-sized (TN, C)
    # intermediates (f32 cast, exp, iota, compare/select, ...) + small (TN,1)s.
    itemsize = jnp.dtype(logits.dtype).itemsize
    bytes_per_row = C * (2 * itemsize + 6 * 4) + 64
    tn = max(8, (vmem_budget_bytes // bytes_per_row // 8) * 8)

    # Never collapse to a single grid step when N allows it: >= 4 blocks keeps
    # the input pipeline double-buffered and lets the "parallel" axis shard
    # across both TensorCores on v7x; >= 2 for small N.
    target_blocks = 4 if N >= 32 else (2 if N >= 16 else 1)
    tn_cap = max(8, (pl.cdiv(N, target_blocks) // 8) * 8)
    tn = min(tn, tn_cap)
    num_blocks = pl.cdiv(N, tn)

    # Pass the computed footprint as the scoped-VMEM limit; [16 MiB, 32 MiB]
    # is safe on v5e (128 MiB phys), v6e (128 MiB phys) and v7x (64 MiB phys).
    footprint = tn * bytes_per_row
    vmem_limit = int(min(max(2 * footprint, 16 * 1024 * 1024),
                         32 * 1024 * 1024))

    kernel = functools.partial(_focal_loss_kernel, gamma=float(gamma))

    per_row = pl.pallas_call(
        kernel,
        grid=(num_blocks,),
        out_shape=jax.ShapeDtypeStruct((N, 1), jnp.float32),
        in_specs=[
            pl.BlockSpec((tn, C), lambda i: (i, 0)),   # logits row tile, full C
            pl.BlockSpec((tn, 1), lambda i: (i, 0)),   # matching targets tile
        ],
        out_specs=pl.BlockSpec((tn, 1), lambda i: (i, 0)),  # per-row focal term
        compiler_params=pltpu.CompilerParams(
            dimension_semantics=("parallel",),
            vmem_limit_bytes=vmem_limit,
        ),
    )(logits, targets_2d)

    # alpha and 1/N folded into a single scalar multiply outside the kernel.
    return jnp.sum(per_row) * jnp.float32(alpha / N)


def _focal_loss_ref(logits, targets, alpha=0.25, gamma=2.0):
    # Pure-JAX reference mirroring torch.nn.functional.cross_entropy(reduction='none').
    logits = logits.astype(jnp.float32)
    lse = jax.nn.logsumexp(logits, axis=-1)
    tgt_logit = jnp.take_along_axis(
        logits, targets[:, None].astype(jnp.int32), axis=-1)[:, 0]
    ce = lse - tgt_logit
    pt = jnp.exp(-ce)
    return jnp.mean(alpha * (1.0 - pt) ** gamma * ce)


if __name__ == "__main__":
    # FocalLoss(alpha=0.25, gamma=2.0) has no learnable parameters.
    key = jax.random.PRNGKey(0)
    k1, k2, k3, k4, k5, k6 = jax.random.split(key, 6)

    # 1) Small (batch, num_classes) consistent with the (N, C) forward contract.
    N, C = 8, 32
    logits = jax.random.normal(k1, (N, C), dtype=jnp.float32)
    targets = jax.random.randint(k2, (N,), 0, C, dtype=jnp.int32)
    loss = jax.block_until_ready(focal_loss(logits, targets, alpha=0.25, gamma=2.0))
    ref = _focal_loss_ref(logits, targets, alpha=0.25, gamma=2.0)
    assert jnp.allclose(loss, ref, rtol=1e-4, atol=1e-6), (loss, ref)

    # 2) N not a multiple of the tile -> multiple blocks + padded last block
    #    (exercises the partial-block output clipping path).
    N2, C2 = 20, 32
    logits2 = jax.random.normal(k3, (N2, C2), dtype=jnp.float32)
    targets2 = jax.random.randint(k4, (N2,), 0, C2, dtype=jnp.int32)
    loss2 = jax.block_until_ready(focal_loss(logits2, targets2, alpha=0.25, gamma=2.0))
    ref2 = _focal_loss_ref(logits2, targets2, alpha=0.25, gamma=2.0)
    assert jnp.allclose(loss2, ref2, rtol=1e-4, atol=1e-6), (loss2, ref2)

    # 3) bf16 logits, 4-block grid (parallel axis), non-128 class count.
    N3, C3 = 64, 48
    logits3 = jax.random.normal(k5, (N3, C3), dtype=jnp.float32).astype(jnp.bfloat16)
    targets3 = jax.random.randint(k6, (N3,), 0, C3, dtype=jnp.int32)
    loss3 = jax.block_until_ready(focal_loss(logits3, targets3, alpha=0.25, gamma=2.0))
    ref3 = _focal_loss_ref(logits3, targets3, alpha=0.25, gamma=2.0)
    assert jnp.allclose(loss3, ref3, rtol=1e-3, atol=1e-6), (loss3, ref3)

    print("KERNEL_OK")
</pallas_src>

<mosaic_0001>
module attributes {stable_mosaic.version = 11 : i64} {
  func.func @_focal_loss_kernel(%arg0: i32, %arg1: memref<8x32xf32, #tpu.memory_space<vmem>>, %arg2: memref<8x1xi32, #tpu.memory_space<vmem>>, %arg3: memref<8x1xf32, #tpu.memory_space<vmem>>) attributes {dimension_semantics = [#tpu.dimension_semantics<parallel>], iteration_bounds = array<i64: 1>, scalar_prefetch = 0 : i64, scratch_operands = 0 : i64, tpu.core_type = #tpu.core_type<tc>, window_params = [{transform_indices = @transform_0, window_bounds = array<i64: 8, 32>}, {transform_indices = @transform_1, window_bounds = array<i64: 8, 1>}, {transform_indices = @transform_2, window_bounds = array<i64: 8, 1>}]} {
    %c0 = arith.constant 0 : index
    %c0_0 = arith.constant 0 : index
    %0 = vector.load %arg1[%c0, %c0_0] : memref<8x32xf32, #tpu.memory_space<vmem>>, vector<8x32xf32>
    %c0_1 = arith.constant 0 : index
    %c0_2 = arith.constant 0 : index
    %1 = vector.load %arg2[%c0_1, %c0_2] : memref<8x1xi32, #tpu.memory_space<vmem>>, vector<8x1xi32>
    %cst = arith.constant dense<0xFF800000> : vector<8xf32>
    %2 = vector.multi_reduction <maximumf>, %0, %cst [1] : vector<8x32xf32> to vector<8xf32>
    %3 = vector.shape_cast %2 : vector<8xf32> to vector<8x1xf32>
    %4 = vector.broadcast %3 : vector<8x1xf32> to vector<8x32xf32>
    %5 = arith.subf %0, %4 : vector<8x32xf32>
    %6 = math.exp %5 : vector<8x32xf32>
    %cst_3 = arith.constant dense<0.000000e+00> : vector<8xf32>
    %7 = vector.multi_reduction <add>, %6, %cst_3 [1] : vector<8x32xf32> to vector<8xf32>
    %8 = vector.shape_cast %7 : vector<8xf32> to vector<8x1xf32>
    %9 = tpu.iota {dimensions = array<i32: 1>} : vector<8x32xi32>
    %10 = vector.broadcast %1 : vector<8x1xi32> to vector<8x32xi32>
    %11 = arith.cmpi eq, %9, %10 : vector<8x32xi32>
    %cst_4 = arith.constant 0.000000e+00 : f32
    %12 = vector.broadcast %cst_4 : f32 to vector<8x32xf32>
    %13 = arith.select %11, %0, %12 : vector<8x32xi1>, vector<8x32xf32>
    %cst_5 = arith.constant dense<0.000000e+00> : vector<8xf32>
    %14 = vector.multi_reduction <add>, %13, %cst_5 [1] : vector<8x32xf32> to vector<8xf32>
    %15 = vector.shape_cast %14 : vector<8xf32> to vector<8x1xf32>
    %16 = math.log %8 : vector<8x1xf32>
    %17 = arith.addf %16, %3 : vector<8x1xf32>
    %18 = arith.subf %17, %15 : vector<8x1xf32>
    %cst_6 = arith.constant 0.000000e+00 : f32
    %19 = vector.broadcast %cst_6 : f32 to vector<8x1xf32>
    %20 = arith.subf %19, %18 : vector<8x1xf32>
    %21 = math.exp %20 : vector<8x1xf32>
    %cst_7 = arith.constant 1.000000e+00 : f32
    %22 = vector.broadcast %cst_7 : f32 to vector<8x1xf32>
    %23 = arith.subf %22, %21 : vector<8x1xf32>
    %24 = arith.mulf %23, %23 : vector<8x1xf32>
    %25 = arith.mulf %24, %18 : vector<8x1xf32>
    %c0_8 = arith.constant 0 : index
    %c0_9 = arith.constant 0 : index
    %26 = vector.load %arg3[%c0_8, %c0_9] : memref<8x1xf32, #tpu.memory_space<vmem>>, vector<8x1xf32>
    tpu.vector_store %arg3[%c0_8, %c0_9], %25 {strides = array<i32>} : memref<8x1xf32, #tpu.memory_space<vmem>>, vector<8x1xf32>,
    return
  }
  func.func @transform_0(%arg0: i32) -> (i32, i32) {
    %c0_i32 = arith.constant 0 : i32
    %c0_i32_0 = arith.constant 0 : i32
    return %arg0, %c0_i32 : i32, i32
  }
  func.func @transform_1(%arg0: i32) -> (i32, i32) {
    %c0_i32 = arith.constant 0 : i32
    %c0_i32_0 = arith.constant 0 : i32
    return %arg0, %c0_i32 : i32, i32
  }
  func.func @transform_2(%arg0: i32) -> (i32, i32) {
    %c0_i32 = arith.constant 0 : i32
    %c0_i32_0 = arith.constant 0 : i32
    return %arg0, %c0_i32 : i32, i32
  }
}

</mosaic_0001>

<llo_original>
// kernel: tpu_custom_call.1
$region0: #{tpu_custom_call.1}
  #allocation0 [shape = 'u32[]', space=smem, size = 0x4, offset = 0x4, fixed_abs, tag = 'smem constant byte address 0x4 - core index']
  #allocation1 [shape = 'u32[72,128]{1,0:T(1,128)}', space=vmem, size = 0x9000, scoped, tag = 'internal scratch']
  %s0 = inlined_call_operand.vmem [shape: f32[8,32], index: 0, kind: input, shape index: {}]
  %s1 = inlined_call_operand.vmem [shape: s32[8,1], index: 1, kind: input, shape index: {}]
  %s2 = inlined_call_operand.vmem [shape: f32[8,1], index: 2, kind: output, shape index: {}]
  %s3 = sld [smem:[#allocation0]]
  $region18: #{tpu_custom_call.1} parent=0
    _
  %s5 = ssub.s32 1, %s3
  %s6 = scalar_select 0, %s5, %s3
  // Predicated region
  $region2: #{tpu_custom_call.1} parent=0 // pred_check
    _
  $region3: #{tpu_custom_call.1} parent=0 // pred_check_branch
    %8 = sbr.rel (0) target = $region5
  $region4: #{tpu_custom_call.1} parent=0 // pred_region
    _
  $region5: #{tpu_custom_call.1} parent=0 // pred_fallthru
    _
  // Predicated region
  $region6: #{tpu_custom_call.1} parent=0 // pred_check
    _
  $region7: #{tpu_custom_call.1} parent=0 // pred_check_branch
    %10 = sbr.rel (0) target = $region9
  $region8: #{tpu_custom_call.1} parent=0 // pred_region
    _
  $region9: #{tpu_custom_call.1} parent=0 // pred_fallthru
    _
  %v11 = vld [vmem:[%s0] sm:$0xff]
  %v12 = vld [vmem:[%s1] sm:$0xff]
  %vm13 = vcmask 261120
  %v14 = vsel %vm13, %v11, -inf
  %15 = vmax.xlane.f32.xlu0 %v14
  %v16 = vpop.xlane.xlu0 %15
  %v17 = vsub.f32 %v11, %v16
  %v18 = vmul.f32 %v17, 1.442695
  %v19 = vpow.pop %v18
  %v20 = vsel %vm13, %v19, 0.0
  %21 = vadd.xlane.f32.xlu0 %v20
  %v22 = vpop.xlane.xlu0 %21
  %v23 = vlaneseq
  %v24 = vand.u32 %v23, 127
  %25 = vset.pattern.permute.xlu0 0
  %26 = vperm.xlu0 %25, %v12
  %v27 = vpop.permute.xlu0 %26
  %vm28 = vcmp.eq.s32.totalorder %v24, %v27
  %v29 = vsel %vm28, %v11, 0.0
  %v30 = vsel %vm13, %v29, 0.0
  %31 = vadd.xlane.f32.xlu0 %v30
  %v32 = vpop.xlane.xlu0 %31
  %v33 = vlog2.pop %v22
  %v34 = vmul.f32 %v33, 0.6931472
  %v35 = vadd.f32 %v34, %v16
  %v36 = vsub.f32 %v35, %v32
  %v37 = vsub.f32 0.0, %v36
  %v38 = vmul.f32 %v37, 1.442695
  %v39 = vpow.pop %v38
  %v40 = vsub.f32 1.0, %v39
  %v41 = vmul.f32 %v40, %v40
  %v42 = vmul.f32 %v41, %v36
  %vm43 = vcmask 7168
  %44 = vst.msk [vmem:[%s2] sm:$0xff] %vm43, %v42
  // Predicated region
  $region10: #{tpu_custom_call.1} parent=0 // pred_check
    _
  $region11: #{tpu_custom_call.1} parent=0 // pred_check_branch
    %46 = sbr.rel (0) target = $region13
  $region12: #{tpu_custom_call.1} parent=0 // pred_region
    _
  $region13: #{tpu_custom_call.1} parent=0 // pred_fallthru
    _
  // Predicated region
  $region14: #{tpu_custom_call.1} parent=0 // pred_check
    _
  $region15: #{tpu_custom_call.1} parent=0 // pred_check_branch
    %48 = sbr.rel (0) target = $region17
  $region16: #{tpu_custom_call.1} parent=0 // pred_region
    _
  $region17: #{tpu_custom_call.1} parent=0 // pred_fallthru
    _

</llo_original>
